<compile_context>
chip_gen: v7x
topology: tpu7x:2x2x1
jax: 0.10.0
libtpu: 0.0.40
codegen_flags: <defaults>
</compile_context>

<pallas_src>
import functools

import jax
import jax.numpy as jnp
from jax.experimental import pallas as pl
from jax.experimental.pallas import tpu as pltpu

PAD = 8  # zero rows kept above/below the live stack inside the scratch


def _rup(a, b):
    return (a + b - 1) // b * b


def _sigmoid(x):
    # tanh formulation -> EUP slot, no VPU divide.
    return 0.5 * jnp.tanh(0.5 * x) + 0.5


def _layout(hidden_dim, output_size, vocab_size, memory_dim):
    """Row/column layout of the two fused weight slabs (bf16 -> 16-aligned rows)."""
    H, O, V, D = hidden_dim, output_size, vocab_size, memory_dim
    A = 16
    off_hh = _rup(V, A)            # W_hh^T rows
    off_c = _rup(off_hh + H, A)    # (W_hh @ W_sh)^T rows
    off_bA = _rup(off_c + D, A)    # fused RNN bias row
    RA = off_bA + A
    off_a0 = _rup(O, 8)            # action logit 0 column
    off_a1 = off_a0 + 1            # action logit 1 column
    off_n = off_a0 + 8             # W_n columns
    NB = off_n + D
    return dict(off_hh=off_hh, off_c=off_c, off_bA=off_bA, RA=RA,
                off_a0=off_a0, off_a1=off_a1, off_n=off_n, NB=NB)


def _srnn_seq_kernel(x_ref, aux_ref, wA_ref, wB_ref, h0_ref, stack0_ref,
                     out_ref, hid_ref, stk_out_ref,
                     h_scr, stk_scr,
                     *, H, V, D, O, M,
                     off_hh, off_c, off_bA, off_a0, off_a1, off_n):
    f32 = jnp.float32
    bf16 = jnp.bfloat16
    t = pl.program_id(0)

    # ---- one-time init: load initial hidden state and stack into scratch -----
    @pl.when(t == 0)
    def _init():
        h_scr[...] = h0_ref[...]
        stk_scr[...] = jnp.zeros_like(stk_scr)
        stk_scr[PAD:PAD + M, :] = stack0_ref[...]

    x = x_ref[0]                                   # (1, V)  bf16
    aux = aux_ref[0]                               # (1, 8)  f32: g0, g1, 1/tau
    h_prev = h_scr[...]                            # (1, H)  f32
    top = stk_scr[PAD:PAD + 1, :].astype(bf16)     # (1, D)  stack top

    # ---- fused RNN cell:  pre = x Wih^T + h Whh^T + top (Whh Wsh)^T + b -------
    pre = (jnp.dot(x, wA_ref[0:V, :], preferred_element_type=f32)
           + jnp.dot(h_prev.astype(bf16), wA_ref[off_hh:off_hh + H, :],
                     preferred_element_type=f32)
           + jnp.dot(top, wA_ref[off_c:off_c + D, :],
                     preferred_element_type=f32)
           + wA_ref[off_bA:off_bA + 1, :].astype(f32))
    h = jnp.tanh(pre)                              # (1, H) f32  == ht
    h_scr[...] = h
    hid_ref[...] = h

    # ---- fused output heads:  z = h [W_y | W_a | W_n]^T + b -------------------
    z = (jnp.dot(h.astype(bf16), wB_ref[0:H, :], preferred_element_type=f32)
         + wB_ref[H:H + 1, :].astype(f32))         # (1, NB) f32

    out_ref[0] = _sigmoid(z[:, 0:O])               # per-step prediction

    # ---- 2-way Gumbel softmax == sigmoid of the scaled logit difference -------
    g0 = aux[:, 0:1]
    g1 = aux[:, 1:2]
    inv_t = aux[:, 2:3]
    l0 = (z[:, off_a0:off_a0 + 1] + g0) * inv_t
    l1 = (z[:, off_a1:off_a1 + 1] + g1) * inv_t
    w_push = _sigmoid(l0 - l1)                     # (1, 1)
    w_pop = 1.0 - w_push

    new_elt = _sigmoid(z[:, off_n:off_n + D])      # (1, D)

    # ---- stack update via shifted static slices of the zero-padded scratch ----
    pop_side = stk_scr[PAD + 1:PAD + 1 + M, :]         # stack[1:] with zero row appended
    push_shift = stk_scr[PAD - 1:PAD - 1 + M, :]       # [0 ; stack[:-1]]
    row = jax.lax.broadcasted_iota(jnp.int32, (M, D), 0)
    push_side = jnp.where(row == 0, new_elt, push_shift)
    new_stack = w_push * push_side + w_pop * pop_side  # (M, D) f32
    stk_scr[PAD:PAD + M, :] = new_stack
    stk_out_ref[...] = new_stack


def pack_params(params, hidden_dim, output_size, vocab_size, memory_dim):
    """Pack all weights & biases into two bf16 slabs (stage-1/2 and stage-3)."""
    H, O, V, D = hidden_dim, output_size, vocab_size, memory_dim
    L = _layout(H, O, V, D)

    wA = jnp.zeros((L["RA"], H), jnp.float32)
    wA = wA.at[0:V, :].set(params["W_ih"].T)
    wA = wA.at[L["off_hh"]:L["off_hh"] + H, :].set(params["W_hh"].T)
    Wc = params["W_hh"] @ params["W_sh"]                       # (H, D)
    wA = wA.at[L["off_c"]:L["off_c"] + D, :].set(Wc.T)
    b_fused = params["b_ih"] + params["b_hh"] + params["W_hh"] @ params["b_sh"]
    wA = wA.at[L["off_bA"], :].set(b_fused)

    wB = jnp.zeros((H + 1, L["NB"]), jnp.float32)
    wB = wB.at[0:H, 0:O].set(params["W_y"].T)
    wB = wB.at[0:H, L["off_a0"]].set(params["W_a"][0])
    wB = wB.at[0:H, L["off_a1"]].set(params["W_a"][1])
    wB = wB.at[0:H, L["off_n"]:L["off_n"] + D].set(params["W_n"].T)
    wB = wB.at[H, 0:O].set(params["b_y"])
    wB = wB.at[H, L["off_a0"]].set(params["b_a"][0])
    wB = wB.at[H, L["off_a1"]].set(params["b_a"][1])
    wB = wB.at[H, L["off_n"]:L["off_n"] + D].set(params["b_n"])
    return wA.astype(jnp.bfloat16), wB.astype(jnp.bfloat16)


def srnn_forward(wA, wB, xs, hidden0, stack, temperature, gumbel, *,
                 hidden_dim, output_size, vocab_size, memory_dim):
    """Run T sequential steps of SRNN_GumbelSoftmax.forward in one kernel call."""
    H, O, V, D = hidden_dim, output_size, vocab_size, memory_dim
    T = xs.shape[0]
    M = stack.shape[0]
    L = _layout(H, O, V, D)

    inv_t = jnp.float32(1.0) / jnp.asarray(temperature, jnp.float32)
    aux = jnp.concatenate(
        [gumbel.astype(jnp.float32),
         jnp.full((T, 1), inv_t, jnp.float32),
         jnp.zeros((T, 5), jnp.float32)], axis=1).reshape(T, 1, 8)

    x_in = xs.astype(jnp.bfloat16)                       # (T, 1, V)
    h0 = hidden0.reshape(1, H).astype(jnp.float32)
    stack0 = stack.astype(jnp.float32)

    kernel = functools.partial(
        _srnn_seq_kernel, H=H, V=V, D=D, O=O, M=M,
        off_hh=L["off_hh"], off_c=L["off_c"], off_bA=L["off_bA"],
        off_a0=L["off_a0"], off_a1=L["off_a1"], off_n=L["off_n"])

    out, hid, new_stack = pl.pallas_call(
        kernel,
        grid=(T,),
        in_specs=[
            pl.BlockSpec((1, 1, V), lambda t: (t, 0, 0)),       # x[t]
            pl.BlockSpec((1, 1, 8), lambda t: (t, 0, 0)),       # gumbel + 1/tau
            pl.BlockSpec((L["RA"], H), lambda t: (0, 0)),       # RNN slab (resident)
            pl.BlockSpec((H + 1, L["NB"]), lambda t: (0, 0)),   # head slab (resident)
            pl.BlockSpec((1, H), lambda t: (0, 0)),             # initial hidden
            pl.BlockSpec((M, D), lambda t: (0, 0)),             # initial stack
        ],
        out_specs=(
            pl.BlockSpec((1, 1, O), lambda t: (t, 0, 0)),       # per-step output
            pl.BlockSpec((1, H), lambda t: (0, 0)),             # final hidden
            pl.BlockSpec((M, D), lambda t: (0, 0)),             # final stack
        ),
        out_shape=(
            jax.ShapeDtypeStruct((T, 1, O), jnp.float32),
            jax.ShapeDtypeStruct((1, H), jnp.float32),
            jax.ShapeDtypeStruct((M, D), jnp.float32),
        ),
        scratch_shapes=[
            pltpu.VMEM((1, H), jnp.float32),                    # carried hidden
            pltpu.VMEM((M + 2 * PAD, D), jnp.float32),          # zero-padded stack
        ],
        compiler_params=pltpu.CompilerParams(
            dimension_semantics=("arbitrary",)),
    )(x_in, aux, wA, wB, h0, stack0)

    return out.reshape(T, O), hid.reshape(1, 1, H), new_stack


def init_params(key, hidden_dim, output_size, vocab_size, memory_dim):
    H, O, V, D = hidden_dim, output_size, vocab_size, memory_dim
    ks = jax.random.split(key, 12)

    def lin(kw, kb, fan_out, fan_in):
        bound = 1.0 / (fan_in ** 0.5)
        w = jax.random.uniform(kw, (fan_out, fan_in), jnp.float32, -bound, bound)
        b = jax.random.uniform(kb, (fan_out,), jnp.float32, -bound, bound)
        return w, b

    W_ih, b_ih = lin(ks[0], ks[1], H, V)
    W_hh, b_hh = lin(ks[2], ks[3], H, H)
    W_y, b_y = lin(ks[4], ks[5], O, H)
    W_n, b_n = lin(ks[6], ks[7], D, H)
    W_a, b_a = lin(ks[8], ks[9], 2, H)
    W_sh, b_sh = lin(ks[10], ks[11], H, D)
    return dict(W_ih=W_ih, b_ih=b_ih, W_hh=W_hh, b_hh=b_hh,
                W_y=W_y, b_y=b_y, W_n=W_n, b_n=b_n,
                W_a=W_a, b_a=b_a, W_sh=W_sh, b_sh=b_sh)


def srnn_reference(params, xs, hidden0, stack, temperature, gumbels):
    """Pure-JAX reference: T sequential SRNN_GumbelSoftmax.forward calls."""
    h = hidden0.reshape(-1).astype(jnp.float32)
    outs = []
    for t in range(xs.shape[0]):
        xv = xs[t].reshape(-1).astype(jnp.float32)
        hidden_bar = params["W_sh"] @ stack[0] + params["b_sh"] + h
        h = jnp.tanh(params["W_ih"] @ xv + params["b_ih"]
                     + params["W_hh"] @ hidden_bar + params["b_hh"])
        outs.append(jax.nn.sigmoid(params["W_y"] @ h + params["b_y"]))
        aw = jax.nn.softmax((params["W_a"] @ h + params["b_a"] + gumbels[t])
                            / temperature)
        new_elt = jax.nn.sigmoid(params["W_n"] @ h + params["b_n"]).reshape(1, -1)
        push = jnp.concatenate([new_elt, stack[:-1]], axis=0)
        pop = jnp.concatenate(
            [stack[1:], jnp.zeros((1, stack.shape[1]), stack.dtype)], axis=0)
        stack = aw[0] * push + aw[1] * pop
    return jnp.stack(outs), h.reshape(1, 1, -1), stack


if __name__ == "__main__":
    hidden_dim, output_size, vocab_size = 32, 8, 16
    n_layers = 1
    memory_size, memory_dim = 104, 5
    temperature = 1.5
    T = 8                                               # sequence length

    root = jax.random.PRNGKey(0)
    kp, kx, kstack, kg = jax.random.split(root, 4)

    params = init_params(kp, hidden_dim, output_size, vocab_size, memory_dim)
    wA, wB = pack_params(params, hidden_dim, output_size, vocab_size, memory_dim)

    xs = jax.random.normal(kx, (T, 1, vocab_size), jnp.float32)   # (seq, batch=1, vocab)
    hidden0 = jnp.zeros((n_layers, 1, hidden_dim), jnp.float32)   # init_hidden()
    stack = jax.random.uniform(kstack, (memory_size, memory_dim), jnp.float32)
    gumbel = jax.random.gumbel(kg, (T, 2), jnp.float32)           # Gumbel(0,1) noise

    fwd = jax.jit(functools.partial(
        srnn_forward, hidden_dim=hidden_dim, output_size=output_size,
        vocab_size=vocab_size, memory_dim=memory_dim))

    out, hidden, new_stack = fwd(wA, wB, xs, hidden0, stack,
                                 jnp.float32(temperature), gumbel)
    jax.block_until_ready((out, hidden, new_stack))

    assert out.shape == (T, output_size)
    assert hidden.shape == (n_layers, 1, hidden_dim)
    assert new_stack.shape == (memory_size, memory_dim)

    # correctness check against a pure-JAX reference using the same Gumbel draws
    ref_out, ref_hidden, ref_stack = srnn_reference(
        params, xs, hidden0, stack, temperature, gumbel)
    assert jnp.allclose(out, ref_out, atol=5e-2, rtol=5e-2)
    assert jnp.allclose(hidden, ref_hidden, atol=5e-2, rtol=5e-2)
    assert jnp.allclose(new_stack, ref_stack, atol=5e-2, rtol=5e-2)

    print("KERNEL_OK")
</pallas_src>

<mosaic_0001>
module attributes {stable_mosaic.version = 11 : i64} {
  func.func @_srnn_seq_kernel(%arg0: i32, %arg1: memref<1x1x16xbf16, #tpu.memory_space<vmem>>, %arg2: memref<1x1x8xf32, #tpu.memory_space<vmem>>, %arg3: memref<80x32xbf16, #tpu.memory_space<vmem>>, %arg4: memref<33x21xbf16, #tpu.memory_space<vmem>>, %arg5: memref<1x32xf32, #tpu.memory_space<vmem>>, %arg6: memref<104x5xf32, #tpu.memory_space<vmem>>, %arg7: memref<1x1x8xf32, #tpu.memory_space<vmem>>, %arg8: memref<1x32xf32, #tpu.memory_space<vmem>>, %arg9: memref<104x5xf32, #tpu.memory_space<vmem>>, %arg10: memref<1x32xf32, #tpu.memory_space<vmem>>, %arg11: memref<120x5xf32, #tpu.memory_space<vmem>>) attributes {dimension_semantics = [#tpu.dimension_semantics<arbitrary>], iteration_bounds = array<i64: 8>, scalar_prefetch = 0 : i64, scratch_operands = 2 : i64, tpu.core_type = #tpu.core_type<tc>, window_params = [{transform_indices = @transform_0, window_bounds = array<i64: 1, 1, 16>}, {transform_indices = @transform_1, window_bounds = array<i64: 1, 1, 8>}, {pipeline_mode = #tpu.pipeline_mode<synchronous>, transform_indices = @transform_2, window_bounds = array<i64: 80, 32>}, {pipeline_mode = #tpu.pipeline_mode<synchronous>, transform_indices = @transform_3, window_bounds = array<i64: 33, 21>}, {pipeline_mode = #tpu.pipeline_mode<synchronous>, transform_indices = @transform_4, window_bounds = array<i64: 1, 32>}, {pipeline_mode = #tpu.pipeline_mode<synchronous>, transform_indices = @transform_5, window_bounds = array<i64: 104, 5>}, {transform_indices = @transform_6, window_bounds = array<i64: 1, 1, 8>}, {pipeline_mode = #tpu.pipeline_mode<synchronous>, transform_indices = @transform_7, window_bounds = array<i64: 1, 32>}, {pipeline_mode = #tpu.pipeline_mode<synchronous>, transform_indices = @transform_8, window_bounds = array<i64: 104, 5>}]} {
    %c0_i32 = arith.constant 0 : i32
    %0 = arith.cmpi eq, %arg0, %c0_i32 : i32
    %1 = arith.extui %0 : i1 to i32
    %c0_i32_0 = arith.constant 0 : i32
    %2 = arith.cmpi ne, %1, %c0_i32_0 : i32
    scf.if %2 {
      %c0_44 = arith.constant 0 : index
      %c0_45 = arith.constant 0 : index
      %84 = vector.load %arg5[%c0_44, %c0_45] : memref<1x32xf32, #tpu.memory_space<vmem>>, vector<1x32xf32>
      %c0_46 = arith.constant 0 : index
      %c0_47 = arith.constant 0 : index
      %85 = vector.load %arg10[%c0_46, %c0_47] : memref<1x32xf32, #tpu.memory_space<vmem>>, vector<1x32xf32>
      tpu.vector_store %arg10[%c0_46, %c0_47], %84 {strides = array<i32>} : memref<1x32xf32, #tpu.memory_space<vmem>>, vector<1x32xf32>,
      %cst_48 = arith.constant 0.000000e+00 : f32
      %86 = vector.broadcast %cst_48 : f32 to vector<120x5xf32>
      %c0_49 = arith.constant 0 : index
      %c0_50 = arith.constant 0 : index
      %87 = vector.load %arg11[%c0_49, %c0_50] : memref<120x5xf32, #tpu.memory_space<vmem>>, vector<120x5xf32>
      tpu.vector_store %arg11[%c0_49, %c0_50], %86 {strides = array<i32>} : memref<120x5xf32, #tpu.memory_space<vmem>>, vector<120x5xf32>,
      %c0_51 = arith.constant 0 : index
      %c0_52 = arith.constant 0 : index
      %88 = vector.load %arg6[%c0_51, %c0_52] : memref<104x5xf32, #tpu.memory_space<vmem>>, vector<104x5xf32>
      %c8_53 = arith.constant 8 : index
      %c0_54 = arith.constant 0 : index
      %89 = vector.load %arg11[%c8_53, %c0_54] : memref<120x5xf32, #tpu.memory_space<vmem>>, vector<104x5xf32>
      tpu.vector_store %arg11[%c8_53, %c0_54], %88 {strides = array<i32>} : memref<120x5xf32, #tpu.memory_space<vmem>>, vector<104x5xf32>,
    } else {
    }
    %c0 = arith.constant 0 : index
    %c0_1 = arith.constant 0 : index
    %c0_2 = arith.constant 0 : index
    %3 = vector.load %arg1[%c0, %c0_1, %c0_2] : memref<1x1x16xbf16, #tpu.memory_space<vmem>>, vector<1x1x16xbf16>
    %4 = vector.shape_cast %3 : vector<1x1x16xbf16> to vector<1x16xbf16>
    %c0_3 = arith.constant 0 : index
    %c0_4 = arith.constant 0 : index
    %c0_5 = arith.constant 0 : index
    %5 = vector.load %arg2[%c0_3, %c0_4, %c0_5] : memref<1x1x8xf32, #tpu.memory_space<vmem>>, vector<1x1x8xf32>
    %6 = vector.shape_cast %5 : vector<1x1x8xf32> to vector<1x8xf32>
    %c0_6 = arith.constant 0 : index
    %c0_7 = arith.constant 0 : index
    %7 = vector.load %arg10[%c0_6, %c0_7] : memref<1x32xf32, #tpu.memory_space<vmem>>, vector<1x32xf32>
    %c8 = arith.constant 8 : index
    %c0_8 = arith.constant 0 : index
    %8 = vector.load %arg11[%c8, %c0_8] : memref<120x5xf32, #tpu.memory_space<vmem>>, vector<1x5xf32>
    %9 = arith.truncf %8 : vector<1x5xf32> to vector<1x5xbf16>
    %c0_9 = arith.constant 0 : index
    %c0_10 = arith.constant 0 : index
    %10 = vector.load %arg3[%c0_9, %c0_10] : memref<80x32xbf16, #tpu.memory_space<vmem>>, vector<16x32xbf16>
    %cst = arith.constant dense<0.000000e+00> : vector<1x32xf32>
    %11 = tpu.matmul %4, %10, %cst {dimension_numbers = #tpu.dot_dimension_numbers<[1], [0], [0], [1], [0, 0, 1, 1], [], []>} : vector<1x16xbf16>, vector<16x32xbf16>, vector<1x32xf32> -> vector<1x32xf32>
    %12 = arith.truncf %7 : vector<1x32xf32> to vector<1x32xbf16>
    %c16 = arith.constant 16 : index
    %c0_11 = arith.constant 0 : index
    %13 = vector.load %arg3[%c16, %c0_11] : memref<80x32xbf16, #tpu.memory_space<vmem>>, vector<32x32xbf16>
    %cst_12 = arith.constant dense<0.000000e+00> : vector<1x32xf32>
    %14 = tpu.matmul %12, %13, %cst_12 {dimension_numbers = #tpu.dot_dimension_numbers<[1], [0], [0], [1], [0, 0, 1, 1], [], []>} : vector<1x32xbf16>, vector<32x32xbf16>, vector<1x32xf32> -> vector<1x32xf32>
    %15 = arith.addf %11, %14 : vector<1x32xf32>
    %c48 = arith.constant 48 : index
    %c0_13 = arith.constant 0 : index
    %16 = vector.load %arg3[%c48, %c0_13] : memref<80x32xbf16, #tpu.memory_space<vmem>>, vector<5x32xbf16>
    %cst_14 = arith.constant dense<0.000000e+00> : vector<1x32xf32>
    %17 = tpu.matmul %9, %16, %cst_14 {dimension_numbers = #tpu.dot_dimension_numbers<[1], [0], [0], [1], [0, 0, 1, 1], [], []>} : vector<1x5xbf16>, vector<5x32xbf16>, vector<1x32xf32> -> vector<1x32xf32>
    %18 = arith.addf %15, %17 : vector<1x32xf32>
    %c64 = arith.constant 64 : index
    %c0_15 = arith.constant 0 : index
    %19 = vector.load %arg3[%c64, %c0_15] : memref<80x32xbf16, #tpu.memory_space<vmem>>, vector<1x32xbf16>
    %20 = arith.extf %19 : vector<1x32xbf16> to vector<1x32xf32>
    %21 = arith.addf %18, %20 : vector<1x32xf32>
    %22 = math.tanh %21 : vector<1x32xf32>
    %c0_16 = arith.constant 0 : index
    %c0_17 = arith.constant 0 : index
    %23 = vector.load %arg10[%c0_16, %c0_17] : memref<1x32xf32, #tpu.memory_space<vmem>>, vector<1x32xf32>
    tpu.vector_store %arg10[%c0_16, %c0_17], %22 {strides = array<i32>} : memref<1x32xf32, #tpu.memory_space<vmem>>, vector<1x32xf32>,
    %c0_18 = arith.constant 0 : index
    %c0_19 = arith.constant 0 : index
    %24 = vector.load %arg8[%c0_18, %c0_19] : memref<1x32xf32, #tpu.memory_space<vmem>>, vector<1x32xf32>
    tpu.vector_store %arg8[%c0_18, %c0_19], %22 {strides = array<i32>} : memref<1x32xf32, #tpu.memory_space<vmem>>, vector<1x32xf32>,
    %25 = arith.truncf %22 : vector<1x32xf32> to vector<1x32xbf16>
    %c0_20 = arith.constant 0 : index
    %c0_21 = arith.constant 0 : index
    %26 = vector.load %arg4[%c0_20, %c0_21] : memref<33x21xbf16, #tpu.memory_space<vmem>>, vector<32x21xbf16>
    %cst_22 = arith.constant dense<0.000000e+00> : vector<1x21xf32>
    %27 = tpu.matmul %25, %26, %cst_22 {dimension_numbers = #tpu.dot_dimension_numbers<[1], [0], [0], [1], [0, 0, 1, 1], [], []>} : vector<1x32xbf16>, vector<32x21xbf16>, vector<1x21xf32> -> vector<1x21xf32>
    %c32 = arith.constant 32 : index
    %c0_23 = arith.constant 0 : index
    %28 = vector.load %arg4[%c32, %c0_23] : memref<33x21xbf16, #tpu.memory_space<vmem>>, vector<1x21xbf16>
    %29 = arith.extf %28 : vector<1x21xbf16> to vector<1x21xf32>
    %30 = arith.addf %27, %29 : vector<1x21xf32>
    %31 = vector.extract_strided_slice %30 {offsets = [0, 0], sizes = [1, 8], strides = [1, 1]} : vector<1x21xf32> to vector<1x8xf32>
    %cst_24 = arith.constant 5.000000e-01 : f32
    %32 = vector.broadcast %cst_24 : f32 to vector<1x8xf32>
    %33 = arith.mulf %32, %31 : vector<1x8xf32>
    %34 = math.tanh %33 : vector<1x8xf32>
    %cst_25 = arith.constant 5.000000e-01 : f32
    %35 = vector.broadcast %cst_25 : f32 to vector<1x8xf32>
    %36 = arith.mulf %35, %34 : vector<1x8xf32>
    %cst_26 = arith.constant 5.000000e-01 : f32
    %37 = vector.broadcast %cst_26 : f32 to vector<1x8xf32>
    %38 = arith.addf %36, %37 : vector<1x8xf32>
    %c0_27 = arith.constant 0 : index
    %c0_28 = arith.constant 0 : index
    %c0_29 = arith.constant 0 : index
    %39 = vector.load %arg7[%c0_27, %c0_28, %c0_29] : memref<1x1x8xf32, #tpu.memory_space<vmem>>, vector<1x1x8xf32>
    %40 = vector.shape_cast %39 : vector<1x1x8xf32> to vector<1x8xf32>
    %41 = vector.shape_cast %38 : vector<1x8xf32> to vector<1x1x8xf32>
    tpu.vector_store %arg7[%c0_27, %c0_28, %c0_29], %41 {strides = array<i32>} : memref<1x1x8xf32, #tpu.memory_space<vmem>>, vector<1x1x8xf32>,
    %42 = vector.extract_strided_slice %6 {offsets = [0, 0], sizes = [1, 1], strides = [1, 1]} : vector<1x8xf32> to vector<1x1xf32>
    %43 = vector.extract_strided_slice %6 {offsets = [0, 1], sizes = [1, 1], strides = [1, 1]} : vector<1x8xf32> to vector<1x1xf32>
    %44 = vector.extract_strided_slice %6 {offsets = [0, 2], sizes = [1, 1], strides = [1, 1]} : vector<1x8xf32> to vector<1x1xf32>
    %45 = vector.extract_strided_slice %30 {offsets = [0, 8], sizes = [1, 1], strides = [1, 1]} : vector<1x21xf32> to vector<1x1xf32>
    %46 = arith.addf %45, %42 : vector<1x1xf32>
    %47 = arith.mulf %46, %44 : vector<1x1xf32>
    %48 = vector.extract_strided_slice %30 {offsets = [0, 9], sizes = [1, 1], strides = [1, 1]} : vector<1x21xf32> to vector<1x1xf32>
    %49 = arith.addf %48, %43 : vector<1x1xf32>
    %50 = arith.mulf %49, %44 : vector<1x1xf32>
    %51 = arith.subf %47, %50 : vector<1x1xf32>
    %cst_30 = arith.constant 5.000000e-01 : f32
    %52 = vector.broadcast %cst_30 : f32 to vector<1x1xf32>
    %53 = arith.mulf %52, %51 : vector<1x1xf32>
    %54 = math.tanh %53 : vector<1x1xf32>
    %cst_31 = arith.constant 5.000000e-01 : f32
    %55 = vector.broadcast %cst_31 : f32 to vector<1x1xf32>
    %56 = arith.mulf %55, %54 : vector<1x1xf32>
    %cst_32 = arith.constant 5.000000e-01 : f32
    %57 = vector.broadcast %cst_32 : f32 to vector<1x1xf32>
    %58 = arith.addf %56, %57 : vector<1x1xf32>
    %cst_33 = arith.constant 1.000000e+00 : f32
    %59 = vector.broadcast %cst_33 : f32 to vector<1x1xf32>
    %60 = arith.subf %59, %58 : vector<1x1xf32>
    %61 = vector.extract_strided_slice %30 {offsets = [0, 16], sizes = [1, 5], strides = [1, 1]} : vector<1x21xf32> to vector<1x5xf32>
    %cst_34 = arith.constant 5.000000e-01 : f32
    %62 = vector.broadcast %cst_34 : f32 to vector<1x5xf32>
    %63 = arith.mulf %62, %61 : vector<1x5xf32>
    %64 = math.tanh %63 : vector<1x5xf32>
    %cst_35 = arith.constant 5.000000e-01 : f32
    %65 = vector.broadcast %cst_35 : f32 to vector<1x5xf32>
    %66 = arith.mulf %65, %64 : vector<1x5xf32>
    %cst_36 = arith.constant 5.000000e-01 : f32
    %67 = vector.broadcast %cst_36 : f32 to vector<1x5xf32>
    %68 = arith.addf %66, %67 : vector<1x5xf32>
    %c9 = arith.constant 9 : index
    %c0_37 = arith.constant 0 : index
    %69 = vector.load %arg11[%c9, %c0_37] : memref<120x5xf32, #tpu.memory_space<vmem>>, vector<104x5xf32>
    %c7 = arith.constant 7 : index
    %c0_38 = arith.constant 0 : index
    %70 = vector.load %arg11[%c7, %c0_38] : memref<120x5xf32, #tpu.memory_space<vmem>>, vector<104x5xf32>
    %71 = tpu.iota {dimensions = array<i32: 0>} : vector<104x5xi32>
    %c0_i32_39 = arith.constant 0 : i32
    %72 = vector.broadcast %c0_i32_39 : i32 to vector<104x5xi32>
    %73 = arith.cmpi eq, %71, %72 : vector<104x5xi32>
    %74 = vector.shape_cast %68 : vector<1x5xf32> to vector<1x5xf32>
    %75 = vector.broadcast %74 : vector<1x5xf32> to vector<104x5xf32>
    %76 = arith.select %73, %75, %70 : vector<104x5xi1>, vector<104x5xf32>
    %77 = vector.broadcast %58 : vector<1x1xf32> to vector<104x5xf32>
    %78 = arith.mulf %77, %76 : vector<104x5xf32>
    %79 = vector.broadcast %60 : vector<1x1xf32> to vector<104x5xf32>
    %80 = arith.mulf %79, %69 : vector<104x5xf32>
    %81 = arith.addf %78, %80 : vector<104x5xf32>
    %c8_40 = arith.constant 8 : index
    %c0_41 = arith.constant 0 : index
    %82 = vector.load %arg11[%c8_40, %c0_41] : memref<120x5xf32, #tpu.memory_space<vmem>>, vector<104x5xf32>
    tpu.vector_store %arg11[%c8_40, %c0_41], %81 {strides = array<i32>} : memref<120x5xf32, #tpu.memory_space<vmem>>, vector<104x5xf32>,
    %c0_42 = arith.constant 0 : index
    %c0_43 = arith.constant 0 : index
    %83 = vector.load %arg9[%c0_42, %c0_43] : memref<104x5xf32, #tpu.memory_space<vmem>>, vector<104x5xf32>
    tpu.vector_store %arg9[%c0_42, %c0_43], %81 {strides = array<i32>} : memref<104x5xf32, #tpu.memory_space<vmem>>, vector<104x5xf32>,
    return
  }
  func.func @transform_0(%arg0: i32) -> (i32, i32, i32) {
    %c0_i32 = arith.constant 0 : i32
    %c0_i32_0 = arith.constant 0 : i32
    %c0_i32_1 = arith.constant 0 : i32
    return %arg0, %c0_i32, %c0_i32_0 : i32, i32, i32
  }
  func.func @transform_1(%arg0: i32) -> (i32, i32, i32) {
    %c0_i32 = arith.constant 0 : i32
    %c0_i32_0 = arith.constant 0 : i32
    %c0_i32_1 = arith.constant 0 : i32
    return %arg0, %c0_i32, %c0_i32_0 : i32, i32, i32
  }
  func.func @transform_2(%arg0: i32) -> (i32, i32) {
    %c0_i32 = arith.constant 0 : i32
    %c0_i32_0 = arith.constant 0 : i32
    %c0_i32_1 = arith.constant 0 : i32
    return %c0_i32, %c0_i32_0 : i32, i32
  }
  func.func @transform_3(%arg0: i32) -> (i32, i32) {
    %c0_i32 = arith.constant 0 : i32
    %c0_i32_0 = arith.constant 0 : i32
    %c0_i32_1 = arith.constant 0 : i32
    return %c0_i32, %c0_i32_0 : i32, i32
  }
  func.func @transform_4(%arg0: i32) -> (i32, i32) {
    %c0_i32 = arith.constant 0 : i32
    %c0_i32_0 = arith.constant 0 : i32
    %c0_i32_1 = arith.constant 0 : i32
    return %c0_i32, %c0_i32_0 : i32, i32
  }
  func.func @transform_5(%arg0: i32) -> (i32, i32) {
    %c0_i32 = arith.constant 0 : i32
    %c0_i32_0 = arith.constant 0 : i32
    %c0_i32_1 = arith.constant 0 : i32
    return %c0_i32, %c0_i32_0 : i32, i32
  }
  func.func @transform_6(%arg0: i32) -> (i32, i32, i32) {
    %c0_i32 = arith.constant 0 : i32
    %c0_i32_0 = arith.constant 0 : i32
    %c0_i32_1 = arith.constant 0 : i32
    return %arg0, %c0_i32, %c0_i32_0 : i32, i32, i32
  }
  func.func @transform_7(%arg0: i32) -> (i32, i32) {
    %c0_i32 = arith.constant 0 : i32
    %c0_i32_0 = arith.constant 0 : i32
    %c0_i32_1 = arith.constant 0 : i32
    return %c0_i32, %c0_i32_0 : i32, i32
  }
  func.func @transform_8(%arg0: i32) -> (i32, i32) {
    %c0_i32 = arith.constant 0 : i32
    %c0_i32_0 = arith.constant 0 : i32
    %c0_i32_1 = arith.constant 0 : i32
    return %c0_i32, %c0_i32_0 : i32, i32
  }
}

</mosaic_0001>

<llo_original>
// kernel: srnn_forward.1
$region0: #{srnn_forward.1}
  #allocation0 [shape = 'u32[]', space=smem, size = 0x4, offset = 0x4, fixed_abs, tag = 'smem constant byte address 0x4 - core index']
  #allocation1 [shape = 'u32[144,128]{1,0:T(1,128)}', space=vmem, size = 0x12000, scoped, tag = 'internal scratch']
  #allocation2 [shape = 'f32[1,32]{1,0:T(1,128)}', space=vmem, size = 0x200, scoped, tag = 'scratch operand']
  #allocation3 [shape = 'f32[120,5]{1,0:T(8,128)}', space=vmem, size = 0xf000, scoped, tag = 'scratch operand']
  %s0 = inlined_call_operand.vmem [shape: bf16[8,1,16], index: 0, kind: input, shape index: {}]
  %s1 = inlined_call_operand.vmem [shape: f32[8,1,8], index: 1, kind: input, shape index: {}]
  %s2 = inlined_call_operand.vmem [shape: bf16[80,32], index: 2, kind: input, shape index: {}]
  %s3 = inlined_call_operand.vmem [shape: bf16[33,21], index: 3, kind: input, shape index: {}]
  %s4 = inlined_call_operand.vmem [shape: f32[1,32], index: 4, kind: input, shape index: {}]
  %s5 = inlined_call_operand.vmem [shape: f32[104,5], index: 5, kind: input, shape index: {}]
  %s6 = inlined_call_operand.hbm [shape: f32[8,1,8], index: 6, kind: output, shape index: {0}]
  %s7 = inlined_call_operand.hbm [shape: f32[1,32], index: 7, kind: output, shape index: {1}]
  %s8 = inlined_call_operand.vmem [shape: f32[104,5], index: 8, kind: output, shape index: {2}]
  %9 = xla_tuple %s6, %s7, %s8
  %s10 = sld [smem:[#allocation0]]
  $region77: #{srnn_forward.1} parent=0
    _
  %s12 = ssub.s32 1, %s10
  %s13 = scalar_select 0, %s12, %s10
  $region1: #{srnn_forward.1} parent=0
    #allocation4 [shape = 'u8[1024]{0}', space=vmem, size = 0x400, scoped, tag = 'output window, operand 0']
    #allocation5 [shape = 's32[2]{0}', space=sflag, size = 0x8, scoped, tag = 'scoped memory for srnn_forward.1']
    #allocation6 [shape = 'u8[512]{0}', space=vmem, size = 0x400, scoped, tag = 'output window, operand 1, single buffered']
    #allocation7 [shape = 's32[1]{0}', space=sflag, size = 0x4, scoped, tag = 'scoped memory for srnn_forward.1']
    %14 = vsyncpa [#allocation5], 0
    %s15 = scalar_lea.sflag [#allocation5], 1
    %16 = vsyncpa %s15, 0
    %17 = vsyncpa [#allocation7], 0
    loop: start=0, step=1, limit=10
    $region2: #{srnn_forward.1} parent=1 // loop_pre_header
      _
    $region3: #{srnn_forward.1} parent=1 // loop_header
      %s19 = sphi 0, %s23
      %p20 = scmp.ge.s32.totalorder %s19, 10
      %s29 = sphi 0, %s31
      %s32 = sphi 0, %s29
      %s33 = sphi 0, %s32
      %s49 = sphi 0, %s33
      %s55 = sphi 0, %s57
      %s58 = sphi 0, %s55
      %s59 = sphi 0, %s58
      %s75 = sphi 0, %s59
      %s79 = sphi 0, %s79
      %s81 = sphi 0, %s79
      %s82 = sphi 0, %s81
      %s96 = sphi 0, %s82
      %s100 = sphi 0, %s100
      %s102 = sphi 0, %s100
      %s103 = sphi 0, %s102
      %s117 = sphi 0, %s103
      %s121 = sphi 0, %s121
      %s123 = sphi 0, %s121
      %s124 = sphi 0, %s123
      %s138 = sphi 0, %s124
      %s142 = sphi 0, %s142
      %s144 = sphi 0, %s142
      %s145 = sphi 0, %s144
      %s159 = sphi 0, %s145
      %s165 = sphi 0, %s167
      %s168 = sphi 0, %s165
      %s169 = sphi 0, %s168
      %s185 = sphi 0, %s169
      %s189 = sphi 0, %s189
      %s191 = sphi 0, %s189
      %s192 = sphi 0, %s191
      %s206 = sphi 0, %s192
      %s210 = sphi 0, %s210
      %s212 = sphi 0, %s210
      %s213 = sphi 0, %s212
      %s227 = sphi 0, %s213
    $region4: #{srnn_forward.1} parent=1 // loop_header_branch
      %22 = sbr.rel (%p20) target = $region8
    $region5: #{srnn_forward.1} parent=1 // loop_body
      %s24 = ssub.s32 %s19, 1
      %s25 = ssub.s32 %s19, 2
      %s26 = sadd.s32 %s19, 1
      %s27 = ssub.s32 %s19, %s26
      %p28 = scmp.eq.s32.totalorder %s27, 0
      %s30 = sadd.s32 %s29, 1
      %s31 = scalar_select %p28, %s29, %s30
      %p34 = pneg %p28
      %p35 = scmp.eq.s32.totalorder %s19, 7
      %p36 = por %p34, %p35
      %p37 = scmp.ne.s32.totalorder %s29, %s32
      %p38 = scmp.eq.s32.totalorder %s19, 0
      %p39 = por %p37, %p38
      %p40 = scmp.ne.s32.totalorder %s29, %s32
      %p41 = scmp.eq.s32.totalorder %s24, 7
      %p42 = por %p40, %p41
      %p43 = scmp.ne.s32.totalorder %s32, %s33
      %p44 = scmp.eq.s32.totalorder %s24, 0
      %p45 = por %p43, %p44
      %p46 = scmp.ne.s32.totalorder %s32, %s33
      %p47 = scmp.eq.s32.totalorder %s25, 7
      %p48 = por %p46, %p47
      %p50 = scmp.ne.s32.totalorder %s33, %s49
      %p51 = scmp.eq.s32.totalorder %s25, 0
      %p52 = por %p50, %p51
      %s53 = ssub.s32 %s19, %s26
      %p54 = scmp.eq.s32.totalorder %s53, 0
      %s56 = sadd.s32 %s55, 1
      %s57 = scalar_select %p54, %s55, %s56
      %p60 = pneg %p54
      %p61 = scmp.eq.s32.totalorder %s19, 7
      %p62 = por %p60, %p61
      %p63 = scmp.ne.s32.totalorder %s55, %s58
      %p64 = scmp.eq.s32.totalorder %s19, 0
      %p65 = por %p63, %p64
      %p66 = scmp.ne.s32.totalorder %s55, %s58
      %p67 = scmp.eq.s32.totalorder %s24, 7
      %p68 = por %p66, %p67
      %p69 = scmp.ne.s32.totalorder %s58, %s59
      %p70 = scmp.eq.s32.totalorder %s24, 0
      %p71 = por %p69, %p70
      %p72 = scmp.ne.s32.totalorder %s58, %s59
      %p73 = scmp.eq.s32.totalorder %s25, 7
      %p74 = por %p72, %p73
      %p76 = scmp.ne.s32.totalorder %s59, %s75
      %p77 = scmp.eq.s32.totalorder %s25, 0
      %p78 = por %p76, %p77
      %s80 = sadd.s32 %s79, 1
      %p83 = scmp.eq.s32.totalorder %s19, 7
      %p84 = scmp.ne.s32.totalorder %s79, %s81
      %p85 = scmp.eq.s32.totalorder %s19, 0
      %p86 = por %p84, %p85
      %p87 = scmp.ne.s32.totalorder %s79, %s81
      %p88 = scmp.eq.s32.totalorder %s24, 7
      %p89 = por %p87, %p88
      %p90 = scmp.ne.s32.totalorder %s81, %s82
      %p91 = scmp.eq.s32.totalorder %s24, 0
      %p92 = por %p90, %p91
      %p93 = scmp.ne.s32.totalorder %s81, %s82
      %p94 = scmp.eq.s32.totalorder %s25, 7
      %p95 = por %p93, %p94
      %p97 = scmp.ne.s32.totalorder %s82, %s96
      %p98 = scmp.eq.s32.totalorder %s25, 0
      %p99 = por %p97, %p98
      %s101 = sadd.s32 %s100, 1
      %p104 = scmp.eq.s32.totalorder %s19, 7
      %p105 = scmp.ne.s32.totalorder %s100, %s102
      %p106 = scmp.eq.s32.totalorder %s19, 0
      %p107 = por %p105, %p106
      %p108 = scmp.ne.s32.totalorder %s100, %s102
      %p109 = scmp.eq.s32.totalorder %s24, 7
      %p110 = por %p108, %p109
      %p111 = scmp.ne.s32.totalorder %s102, %s103
      %p112 = scmp.eq.s32.totalorder %s24, 0
      %p113 = por %p111, %p112
      %p114 = scmp.ne.s32.totalorder %s102, %s103
      %p115 = scmp.eq.s32.totalorder %s25, 7
      %p116 = por %p114, %p115
      %p118 = scmp.ne.s32.totalorder %s103, %s117
      %p119 = scmp.eq.s32.totalorder %s25, 0
      %p120 = por %p118, %p119
      %s122 = sadd.s32 %s121, 1
      %p125 = scmp.eq.s32.totalorder %s19, 7
      %p126 = scmp.ne.s32.totalorder %s121, %s123
      %p127 = scmp.eq.s32.totalorder %s19, 0
      %p128 = por %p126, %p127
      %p129 = scmp.ne.s32.totalorder %s121, %s123
      %p130 = scmp.eq.s32.totalorder %s24, 7
      %p131 = por %p129, %p130
      %p132 = scmp.ne.s32.totalorder %s123, %s124
      %p133 = scmp.eq.s32.totalorder %s24, 0
      %p134 = por %p132, %p133
      %p135 = scmp.ne.s32.totalorder %s123, %s124
      %p136 = scmp.eq.s32.totalorder %s25, 7
      %p137 = por %p135, %p136
      %p139 = scmp.ne.s32.totalorder %s124, %s138
      %p140 = scmp.eq.s32.totalorder %s25, 0
      %p141 = por %p139, %p140
      %s143 = sadd.s32 %s142, 1
      %p146 = scmp.eq.s32.totalorder %s19, 7
      %p147 = scmp.ne.s32.totalorder %s142, %s144
      %p148 = scmp.eq.s32.totalorder %s19, 0
      %p149 = por %p147, %p148
      %p150 = scmp.ne.s32.totalorder %s142, %s144
      %p151 = scmp.eq.s32.totalorder %s24, 7
      %p152 = por %p150, %p151
      %p153 = scmp.ne.s32.totalorder %s144, %s145
      %p154 = scmp.eq.s32.totalorder %s24, 0
      %p155 = por %p153, %p154
      %p156 = scmp.ne.s32.totalorder %s144, %s145
      %p157 = scmp.eq.s32.totalorder %s25, 7
      %p158 = por %p156, %p157
      %p160 = scmp.ne.s32.totalorder %s145, %s159
      %p161 = scmp.eq.s32.totalorder %s25, 0
      %p162 = por %p160, %p161
      %s163 = ssub.s32 %s19, %s26
      %p164 = scmp.eq.s32.totalorder %s163, 0
      %s166 = sadd.s32 %s165, 1
      %s167 = scalar_select %p164, %s165, %s166
      %p170 = pneg %p164
      %p171 = scmp.eq.s32.totalorder %s19, 7
      %p172 = por %p170, %p171
      %p173 = scmp.ne.s32.totalorder %s165, %s168
      %p174 = scmp.eq.s32.totalorder %s19, 0
      %p175 = por %p173, %p174
      %p176 = scmp.ne.s32.totalorder %s165, %s168
      %p177 = scmp.eq.s32.totalorder %s24, 7
      %p178 = por %p176, %p177
      %p179 = scmp.ne.s32.totalorder %s168, %s169
      %p180 = scmp.eq.s32.totalorder %s24, 0
      %p181 = por %p179, %p180
      %p182 = scmp.ne.s32.totalorder %s168, %s169
      %p183 = scmp.eq.s32.totalorder %s25, 7
      %p184 = por %p182, %p183
      %p186 = scmp.ne.s32.totalorder %s169, %s185
      %p187 = scmp.eq.s32.totalorder %s25, 0
      %p188 = por %p186, %p187
      %s190 = sadd.s32 %s189, 1
      %p193 = scmp.eq.s32.totalorder %s19, 7
      %p194 = scmp.ne.s32.totalorder %s189, %s191
      %p195 = scmp.eq.s32.totalorder %s19, 0
      %p196 = por %p194, %p195
      %p197 = scmp.ne.s32.totalorder %s189, %s191
      %p198 = scmp.eq.s32.totalorder %s24, 7
      %p199 = por %p197, %p198
      %p200 = scmp.ne.s32.totalorder %s191, %s192
      %p201 = scmp.eq.s32.totalorder %s24, 0
      %p202 = por %p200, %p201
      %p203 = scmp.ne.s32.totalorder %s191, %s192
      %p204 = scmp.eq.s32.totalorder %s25, 7
      %p205 = por %p203, %p204
      %p207 = scmp.ne.s32.totalorder %s192, %s206
      %p208 = scmp.eq.s32.totalorder %s25, 0
      %p209 = por %p207, %p208
      %s211 = sadd.s32 %s210, 1
      %p214 = scmp.eq.s32.totalorder %s19, 7
      %p215 = scmp.ne.s32.totalorder %s210, %s212
      %p216 = scmp.eq.s32.totalorder %s19, 0
      %p217 = por %p215, %p216
      %p218 = scmp.ne.s32.totalorder %s210, %s212
      %p219 = scmp.eq.s32.totalorder %s24, 7
      %p220 = por %p218, %p219
      %p221 = scmp.ne.s32.totalorder %s212, %s213
      %p222 = scmp.eq.s32.totalorder %s24, 0
      %p223 = por %p221, %p222
      %p224 = scmp.ne.s32.totalorder %s212, %s213
      %p225 = scmp.eq.s32.totalorder %s25, 7
      %p226 = por %p224, %p225
      %p228 = scmp.ne.s32.totalorder %s213, %s227
      %p229 = scmp.eq.s32.totalorder %s25, 0
      %p230 = por %p228, %p229
      %p231 = scmp.le.s32.totalorder 1, %s19
      %p232 = scmp.lt.s32.totalorder %s19, 9
      %p233 = pnand %p231, %p232
      %p234 = pneg %p233
      // Predicated region
      $region9: #{srnn_forward.1} parent=5 // pred_check
        _
      $region10: #{srnn_forward.1} parent=5 // pred_check_branch
        %236 = sbr.rel (%p233) target = $region12
      $region11: #{srnn_forward.1} parent=5 // pred_region
        %s237 = ssub.s32 %s19, 1
        // Predicated region
        $region13: #{srnn_forward.1} parent=11 // pred_check
          %p238 = pneg %p92
        $region14: #{srnn_forward.1} parent=11 // pred_check_branch
          %240 = sbr.rel (%p238) target = $region16
        $region15: #{srnn_forward.1} parent=11 // pred_region
          _
        $region16: #{srnn_forward.1} parent=11 // pred_fallthru
          _
        // Predicated region
        $region17: #{srnn_forward.1} parent=11 // pred_check
          %p241 = pneg %p113
        $region18: #{srnn_forward.1} parent=11 // pred_check_branch
          %243 = sbr.rel (%p241) target = $region20
        $region19: #{srnn_forward.1} parent=11 // pred_region
          _
        $region20: #{srnn_forward.1} parent=11 // pred_fallthru
          _
        // Predicated region
        $region21: #{srnn_forward.1} parent=11 // pred_check
          %p244 = pneg %p134
        $region22: #{srnn_forward.1} parent=11 // pred_check_branch
          %246 = sbr.rel (%p244) target = $region24
        $region23: #{srnn_forward.1} parent=11 // pred_region
          _
        $region24: #{srnn_forward.1} parent=11 // pred_fallthru
          _
        // Predicated region
        $region25: #{srnn_forward.1} parent=11 // pred_check
          %p247 = pneg %p155
        $region26: #{srnn_forward.1} parent=11 // pred_check_branch
          %249 = sbr.rel (%p247) target = $region28
        $region27: #{srnn_forward.1} parent=11 // pred_region
          _
        $region28: #{srnn_forward.1} parent=11 // pred_fallthru
          _
      $region12: #{srnn_forward.1} parent=5 // pred_fallthru
        _
      %p250 = scmp.lt.s32.totalorder %s19, 8
      // Predicated region
      $region29: #{srnn_forward.1} parent=5 // pred_check
        %p251 = pneg %p250
      $region30: #{srnn_forward.1} parent=5 // pred_check_branch
        %253 = sbr.rel (%p251) target = $region32
      $region31: #{srnn_forward.1} parent=5 // pred_region
        // Predicated region
        $region33: #{srnn_forward.1} parent=31 // pred_check
          %p254 = pneg %p39
        $region34: #{srnn_forward.1} parent=31 // pred_check_branch
          %256 = sbr.rel (%p254) target = $region36
        $region35: #{srnn_forward.1} parent=31 // pred_region
          %p257 = scmp.lt.s32.totalorder %s19, 7
          %s258 = scalar_select %p257, %s19, 7
          %s259 = scalar_lea.vmem %s0, %s258
        $region36: #{srnn_forward.1} parent=31 // pred_fallthru
          _
        // Predicated region
        $region37: #{srnn_forward.1} parent=31 // pred_check
          %p260 = pneg %p65
        $region38: #{srnn_forward.1} parent=31 // pred_check_branch
          %262 = sbr.rel (%p260) target = $region40
        $region39: #{srnn_forward.1} parent=31 // pred_region
          %p263 = scmp.lt.s32.totalorder %s19, 7
          %s264 = scalar_select %p263, %s19, 7
          %s265 = scalar_lea.vmem %s1, %s264
        $region40: #{srnn_forward.1} parent=31 // pred_fallthru
          _
      $region32: #{srnn_forward.1} parent=5 // pred_fallthru
        _
      %p266 = scmp.le.s32.totalorder 1, %s19
      %p267 = scmp.lt.s32.totalorder %s19, 9
      %p268 = pnand %p266, %p267
      %p269 = pneg %p268
      // Predicated region
      $region41: #{srnn_forward.1} parent=5 // pred_check
        _
      $region42: #{srnn_forward.1} parent=5 // pred_check_branch
        %271 = sbr.rel (%p268) target = $region44
      $region43: #{srnn_forward.1} parent=5 // pred_region
        %s272 = ssub.s32 %s19, 1
        %p273 = scmp.lt.s32.totalorder %s24, 7
        %s274 = scalar_select %p273, %s24, 7
        %s275 = scalar_lea.vmem %s0, %s274
        %p276 = pneg %p45
        %p277 = pneg %p42
        %p278 = scmp.lt.s32.totalorder %s24, 7
        %s279 = scalar_select %p278, %s24, 7
        %s280 = scalar_lea.vmem %s1, %s279
        %p281 = pneg %p71
        %p282 = pneg %p68
        %p283 = pneg %p92
        %p284 = pneg %p89
        %p285 = pneg %p113
        %p286 = pneg %p110
        %p287 = pneg %p134
        %p288 = pneg %p131
        %p289 = pneg %p155
        %p290 = pneg %p152
        %p291 = pneg %p181
        %p292 = pneg %p178
        %s293 = sand.u32 %s168, 1
        %s294 = scalar_lea.sflag [#allocation5], %s293
        %s295 = sand.u32 %s168, 1
        %s296 = scalar_lea.vmem [#allocation4], %s295
        %p297 = pneg %p202
        %p298 = pneg %p199
        %p299 = pneg %p223
        %p300 = pneg %p220
        %p301 = scmp.lt.s32.totalorder %s24, 7
        %s302 = scalar_select %p301, %s24, 7
        %s303 = scalar_lea.vmem %s0, %s302
        %p304 = scmp.lt.s32.totalorder %s24, 7
        %s305 = scalar_select %p304, %s24, 7
        %s306 = scalar_lea.vmem %s1, %s305
        %p308 = scmp.eq.s32.totalorder %s24, 0
        // Predicated region
        $region45: #{srnn_forward.1} parent=43 // pred_check
          %p309 = pneg %p308
        $region46: #{srnn_forward.1} parent=43 // pred_check_branch
          %311 = sbr.rel (%p309) target = $region48
        $region47: #{srnn_forward.1} parent=43 // pred_region
          %v312 = vld [vmem:[%s4] sm:$0x1]
          %vm313 = vcmask 253952
          %314 = vst.msk [vmem:[#allocation2] sm:$0x1] %vm313, %v312
          %vm315 = vcmask 39936
          %316 = vst.msk [vmem:[#allocation3] sm:$0xff] %vm315, 0.0
          %317 = vst.msk [vmem:[#allocation3 + $0x8] sm:$0xff] %vm315, 0.0
          %318 = vst.msk [vmem:[#allocation3 + $0x10] sm:$0xff] %vm315, 0.0
          %319 = vst.msk [vmem:[#allocation3 + $0x18] sm:$0xff] %vm315, 0.0
          %320 = vst.msk [vmem:[#allocation3 + $0x20] sm:$0xff] %vm315, 0.0
          %321 = vst.msk [vmem:[#allocation3 + $0x28] sm:$0xff] %vm315, 0.0
          %322 = vst.msk [vmem:[#allocation3 + $0x30] sm:$0xff] %vm315, 0.0
          %323 = vst.msk [vmem:[#allocation3 + $0x38] sm:$0xff] %vm315, 0.0
          %324 = vst.msk [vmem:[#allocation3 + $0x40] sm:$0xff] %vm315, 0.0
          %325 = vst.msk [vmem:[#allocation3 + $0x48] sm:$0xff] %vm315, 0.0
          %326 = vst.msk [vmem:[#allocation3 + $0x50] sm:$0xff] %vm315, 0.0
          %327 = vst.msk [vmem:[#allocation3 + $0x58] sm:$0xff] %vm315, 0.0
          %328 = vst.msk [vmem:[#allocation3 + $0x60] sm:$0xff] %vm315, 0.0
          %329 = vst.msk [vmem:[#allocation3 + $0x68] sm:$0xff] %vm315, 0.0
          %330 = vst.msk [vmem:[#allocation3 + $0x70] sm:$0xff] %vm315, 0.0
          %v331 = vld [vmem:[%s5] sm:$0xff]
          %v332 = vld [vmem:[%s5 + $0x8] sm:$0xff]
          %v333 = vld [vmem:[%s5 + $0x10] sm:$0xff]
          %v334 = vld [vmem:[%s5 + $0x18] sm:$0xff]
          %v335 = vld [vmem:[%s5 + $0x20] sm:$0xff]
          %v336 = vld [vmem:[%s5 + $0x28] sm:$0xff]
          %v337 = vld [vmem:[%s5 + $0x30] sm:$0xff]
          %v338 = vld [vmem:[%s5 + $0x38] sm:$0xff]
          %v339 = vld [vmem:[%s5 + $0x40] sm:$0xff]
          %v340 = vld [vmem:[%s5 + $0x48] sm:$0xff]
          %v341 = vld [vmem:[%s5 + $0x50] sm:$0xff]
          %v342 = vld [vmem:[%s5 + $0x58] sm:$0xff]
          %v343 = vld [vmem:[%s5 + $0x60] sm:$0xff]
          %344 = vst.msk [vmem:[#allocation3 + $0x8] sm:$0xff] %vm315, %v331
          %345 = vst.msk [vmem:[#allocation3 + $0x10] sm:$0xff] %vm315, %v332
          %346 = vst.msk [vmem:[#allocation3 + $0x18] sm:$0xff] %vm315, %v333
          %347 = vst.msk [vmem:[#allocation3 + $0x20] sm:$0xff] %vm315, %v334
          %348 = vst.msk [vmem:[#allocation3 + $0x28] sm:$0xff] %vm315, %v335
          %349 = vst.msk [vmem:[#allocation3 + $0x30] sm:$0xff] %vm315, %v336
          %350 = vst.msk [vmem:[#allocation3 + $0x38] sm:$0xff] %vm315, %v337
          %351 = vst.msk [vmem:[#allocation3 + $0x40] sm:$0xff] %vm315, %v338
          %352 = vst.msk [vmem:[#allocation3 + $0x48] sm:$0xff] %vm315, %v339
          %353 = vst.msk [vmem:[#allocation3 + $0x50] sm:$0xff] %vm315, %v340
          %354 = vst.msk [vmem:[#allocation3 + $0x58] sm:$0xff] %vm315, %v341
          %355 = vst.msk [vmem:[#allocation3 + $0x60] sm:$0xff] %vm315, %v342
          %356 = vst.msk [vmem:[#allocation3 + $0x68] sm:$0xff] %vm315, %v343
        $region48: #{srnn_forward.1} parent=43 // pred_fallthru
          _
        %v357 = vld [vmem:[%s303] sm:$0x1]
        %v358 = vld [vmem:[%s306] sm:$0x1]
        %v359 = vld [vmem:[#allocation2] sm:$0x1]
        %v360 = vld [vmem:[#allocation3 + $0x8] sm:$0x1]
        %v361 = vpack.c.bf16 %v360, %v360
        %v362 = vld [vmem:[%s2] sm:$0xf]
        %v363 = vld [vmem:[%s2 + $0x4] sm:$0xf]
        %v364 = vpack.c.bf16 %v359, %v359
        %v365 = vld [vmem:[%s2 + $0x8] sm:$0xf]
        %v366 = vld [vmem:[%s2 + $0xc] sm:$0xf]
        %v367 = vld [vmem:[%s2 + $0x10] sm:$0xf]
        %v368 = vld [vmem:[%s2 + $0x14] sm:$0xf]
        %v373 = vunpack.c.l.b16 %v365
        %v374 = vunpack.c.l.b16 %v366
        %v375 = vunpack.c.l.b16 %v367
        %v376 = vunpack.c.l.b16 %v368
        %v377 = vpack.c.b16 %v374, %v373
        %v378 = vpack.c.b16 %v376, %v375
        %vm381 = vcmask 261120
        %v383 = vsel %vm381, %v364, 0
        %385 = vmatprep.subr.bf16.mxu0 0
        %386 = vmatpush1.bf16.msra.mxu0 %v377
        %387 = vmatprep.subr.bf16.mxu0 0
        %388 = vmatpush1.bf16.msra.mxu0 %v378
        %389 = vmatprep.subr.bf16.mxu0 0
        %390 = vmatpush1.bf16.msra.mxu0 0
        %391 = vmatprep.subr.bf16.mxu0 0
        %392 = vmatpush1.bf16.msra.mxu0 0
        %393 = vmatprep.subr.bf16.mxu0 0
        %394 = vmatpush1.bf16.msra.mxu0 0
        %395 = vmatprep.subr.bf16.mxu0 0
        %396 = vmatpush1.bf16.msra.mxu0 0
        %397 = vmatprep.subr.bf16.mxu0 0
        %398 = vmatpush1.bf16.msra.mxu0 0
        %399 = vmatprep.subr.bf16.mxu0 0
        %400 = vmatpush1.bf16.msra.mxu0 0
        %401 = vmatprep.subr.bf16.mxu0 0
        %402 = vmatpush1.bf16.msra.mxu0 0
        %403 = vmatprep.subr.bf16.mxu0 0
        %404 = vmatpush1.bf16.msra.mxu0 0
        %405 = vmatprep.subr.bf16.mxu0 0
        %406 = vmatpush1.bf16.msra.mxu0 0
        %407 = vmatprep.subr.bf16.mxu0 0
        %408 = vmatpush1.bf16.msra.mxu0 0
        %409 = vmatprep.subr.bf16.mxu0 0
        %410 = vmatpush1.bf16.msra.mxu0 0
        %411 = vmatprep.subr.bf16.mxu0 0
        %412 = vmatpush1.bf16.msra.mxu0 0
        %413 = vmatprep.subr.bf16.mxu0 0
        %414 = vmatpush1.bf16.msra.mxu0 0
        %415 = vmatprep.subr.bf16.mxu0 0
        %416 = vmatpush1.bf16.msra.mxu0 0
        %417 = vmatprep.mubr.bf16.mxu0 0
        %418 = vmatmul.mubr.bf16.gmra.mrb[0].mxu0 %v383
        %v419 = vpop.f32.mrb[0].mxu0
        %v420 = vadd.f32 0.0, %v419
        %v421 = vpop.f32.mrb[0].mxu0
        %v422 = vpop.f32.mrb[0].mxu0
        %v423 = vpop.f32.mrb[0].mxu0
        %424 = vdwg.mxu0
        %v427 = vunpack.c.l.b16 %v362
        %v428 = vunpack.c.l.b16 %v363
        %v429 = vpack.c.b16 %v428, %v427
        %vm431 = vcmask 130048
        %v433 = vsel %vm431, %v357, 0
        %435 = vmatprep.subr.bf16.mxu0 0
        %436 = vmatpush1.bf16.msra.mxu0 %v429
        %437 = vmatprep.subr.bf16.mxu0 0
        %438 = vmatpush1.bf16.msra.mxu0 0
        %439 = vmatprep.subr.bf16.mxu0 0
        %440 = vmatpush1.bf16.msra.mxu0 0
        %441 = vmatprep.subr.bf16.mxu0 0
        %442 = vmatpush1.bf16.msra.mxu0 0
        %443 = vmatprep.subr.bf16.mxu0 0
        %444 = vmatpush1.bf16.msra.mxu0 0
        %445 = vmatprep.subr.bf16.mxu0 0
        %446 = vmatpush1.bf16.msra.mxu0 0
        %447 = vmatprep.subr.bf16.mxu0 0
        %448 = vmatpush1.bf16.msra.mxu0 0
        %449 = vmatprep.subr.bf16.mxu0 0
        %450 = vmatpush1.bf16.msra.mxu0 0
        %451 = vmatprep.subr.bf16.mxu0 0
        %452 = vmatpush1.bf16.msra.mxu0 0
        %453 = vmatprep.subr.bf16.mxu0 0
        %454 = vmatpush1.bf16.msra.mxu0 0
        %455 = vmatprep.subr.bf16.mxu0 0
        %456 = vmatpush1.bf16.msra.mxu0 0
        %457 = vmatprep.subr.bf16.mxu0 0
        %458 = vmatpush1.bf16.msra.mxu0 0
        %459 = vmatprep.subr.bf16.mxu0 0
        %460 = vmatpush1.bf16.msra.mxu0 0
        %461 = vmatprep.subr.bf16.mxu0 0
        %462 = vmatpush1.bf16.msra.mxu0 0
        %463 = vmatprep.subr.bf16.mxu0 0
        %464 = vmatpush1.bf16.msra.mxu0 0
        %465 = vmatprep.subr.bf16.mxu0 0
        %466 = vmatpush1.bf16.msra.mxu0 0
        %467 = vmatprep.mubr.bf16.mxu0 0
        %468 = vmatmul.mubr.bf16.gmra.mrb[0].mxu0 %v433
        %v469 = vpop.f32.mrb[0].mxu0
        %v470 = vadd.f32 %v420, %v469
        %v471 = vpop.f32.mrb[0].mxu0
        %v472 = vpop.f32.mrb[0].mxu0
        %v473 = vpop.f32.mrb[0].mxu0
        %474 = vdwg.mxu0
        %v475 = vld [vmem:[%s2 + $0x18] sm:$0x7]
        %vm476 = vcmask 39936
        %v478 = vsel %vm476, %v361, 0
        %vm480 = vcmask 1041408
        %vm481 = vcmask 1042432
        %v482 = vsel %vm480, 4294967295, 65535
        %v483 = vsel %vm481, %v482, 0
        %v485 = vand.u32 %v475, %v483
        %487 = vmatprep.subr.bf16.mxu0 0
        %488 = vmatpush1.bf16.msra.mxu0 %v485
        %489 = vmatprep.subr.bf16.mxu0 0
        %490 = vmatpush1.bf16.msra.mxu0 0
        %491 = vmatprep.subr.bf16.mxu0 0
        %492 = vmatpush1.bf16.msra.mxu0 0
        %493 = vmatprep.subr.bf16.mxu0 0
        %494 = vmatpush1.bf16.msra.mxu0 0
        %495 = vmatprep.subr.bf16.mxu0 0
        %496 = vmatpush1.bf16.msra.mxu0 0
        %497 = vmatprep.subr.bf16.mxu0 0
        %498 = vmatpush1.bf16.msra.mxu0 0
        %499 = vmatprep.subr.bf16.mxu0 0
        %500 = vmatpush1.bf16.msra.mxu0 0
        %501 = vmatprep.subr.bf16.mxu0 0
        %502 = vmatpush1.bf16.msra.mxu0 0
        %503 = vmatprep.subr.bf16.mxu0 0
        %504 = vmatpush1.bf16.msra.mxu0 0
        %505 = vmatprep.subr.bf16.mxu0 0
        %506 = vmatpush1.bf16.msra.mxu0 0
        %507 = vmatprep.subr.bf16.mxu0 0
        %508 = vmatpush1.bf16.msra.mxu0 0
        %509 = vmatprep.subr.bf16.mxu0 0
        %510 = vmatpush1.bf16.msra.mxu0 0
        %511 = vmatprep.subr.bf16.mxu0 0
        %512 = vmatpush1.bf16.msra.mxu0 0
        %513 = vmatprep.subr.bf16.mxu0 0
        %514 = vmatpush1.bf16.msra.mxu0 0
        %515 = vmatprep.subr.bf16.mxu0 0
        %516 = vmatpush1.bf16.msra.mxu0 0
        %517 = vmatprep.subr.bf16.mxu0 0
        %518 = vmatpush1.bf16.msra.mxu0 0
        %519 = vmatprep.mubr.bf16.mxu0 0
        %520 = vmatmul.mubr.bf16.gmra.mrb[0].mxu0 %v478
        %v521 = vpop.f32.mrb[0].mxu0
        %v522 = vadd.f32 0.0, %v521
        %v523 = vpop.f32.mrb[0].mxu0
        %v524 = vpop.f32.mrb[0].mxu0
        %v525 = vpop.f32.mrb[0].mxu0
        %526 = vdwg.mxu0
        %v527 = vadd.f32 %v470, %v522
        %v528 = vld [vmem:[%s2 + $0x20] sm:$0x1]
        %v529 = vunpack.c.l.bf16 %v528
        %v530 = vadd.f32 %v527, %v529
        %v531 = vtanh.pop %v530
        %vm532 = vcmask 253952
        %533 = vst.msk [vmem:[#allocation2] sm:$0x1] %vm532, %v531
        %534 = vst.msk [vmem:[#allocation6] sm:$0x1] %vm532, %v531
        %v535 = vpack.c.bf16 %v531, %v531
        %v536 = vld [vmem:[%s3] sm:$0xf]
        %v537 = vld [vmem:[%s3 + $0x4] sm:$0xf]
        %v538 = vld [vmem:[%s3 + $0x8] sm:$0xf]
        %v539 = vld [vmem:[%s3 + $0xc] sm:$0xf]
        %v540 = vld [vmem:[%s3 + $0x10] sm:$0x1]
        %v541 = vunpack.c.l.bf16 %v540
        %v546 = vunpack.c.l.b16 %v536
        %v547 = vunpack.c.l.b16 %v537
        %v548 = vunpack.c.l.b16 %v538
        %v549 = vunpack.c.l.b16 %v539
        %v550 = vpack.c.b16 %v547, %v546
        %v551 = vpack.c.b16 %v549, %v548
        %v555 = vsel %vm381, %v535, 0
        %557 = vmatprep.subr.bf16.mxu0 0
        %558 = vmatpush1.bf16.msra.mxu0 %v550
        %559 = vmatprep.subr.bf16.mxu0 0
        %560 = vmatpush1.bf16.msra.mxu0 %v551
        %561 = vmatprep.subr.bf16.mxu0 0
        %562 = vmatpush1.bf16.msra.mxu0 0
        %563 = vmatprep.subr.bf16.mxu0 0
        %564 = vmatpush1.bf16.msra.mxu0 0
        %565 = vmatprep.subr.bf16.mxu0 0
        %566 = vmatpush1.bf16.msra.mxu0 0
        %567 = vmatprep.subr.bf16.mxu0 0
        %568 = vmatpush1.bf16.msra.mxu0 0
        %569 = vmatprep.subr.bf16.mxu0 0
        %570 = vmatpush1.bf16.msra.mxu0 0
        %571 = vmatprep.subr.bf16.mxu0 0
        %572 = vmatpush1.bf16.msra.mxu0 0
        %573 = vmatprep.subr.bf16.mxu0 0
        %574 = vmatpush1.bf16.msra.mxu0 0
        %575 = vmatprep.subr.bf16.mxu0 0
        %576 = vmatpush1.bf16.msra.mxu0 0
        %577 = vmatprep.subr.bf16.mxu0 0
        %578 = vmatpush1.bf16.msra.mxu0 0
        %579 = vmatprep.subr.bf16.mxu0 0
        %580 = vmatpush1.bf16.msra.mxu0 0
        %581 = vmatprep.subr.bf16.mxu0 0
        %582 = vmatpush1.bf16.msra.mxu0 0
        %583 = vmatprep.subr.bf16.mxu0 0
        %584 = vmatpush1.bf16.msra.mxu0 0
        %585 = vmatprep.subr.bf16.mxu0 0
        %586 = vmatpush1.bf16.msra.mxu0 0
        %587 = vmatprep.subr.bf16.mxu0 0
        %588 = vmatpush1.bf16.msra.mxu0 0
        %589 = vmatprep.mubr.bf16.mxu0 0
        %590 = vmatmul.mubr.bf16.gmra.mrb[0].mxu0 %v555
        %v591 = vpop.f32.mrb[0].mxu0
        %v592 = vadd.f32 %v541, %v591
        %v593 = vpop.f32.mrb[0].mxu0
        %v594 = vpop.f32.mrb[0].mxu0
        %v595 = vpop.f32.mrb[0].mxu0
        %596 = vdwg.mxu0
        %v597 = vmul.f32 %v592, 0.5
        %v598 = vtanh.pop %v597
        %v599 = vmul.f32 %v598, 0.5
        %v600 = vadd.f32 %v599, 0.5
        %vm601 = vcmask 57344
        %602 = vst.msk [vmem:[%s296] sm:$0x1] %vm601, %v600
        %v604 = vlaneseq
        %v605 = vshrl.u32 %v604, 7
        %v606 = vsub.s32 0, %v605
        %v607 = vrot.slane %v358, %v606
        %608 = vrot.lane.b32.xlu0 %v607, 8
        %v609 = vpop.permute.xlu0 %608
        %v611 = vadd.f32 %v592, %v609
        %612 = vrot.lane.b32.xlu0 %v607, 6
        %v613 = vpop.permute.xlu0 %612
        %v615 = vmul.f32 %v611, %v613
        %616 = vrot.lane.b32.xlu0 %v607, 7
        %v617 = vpop.permute.xlu0 %616
        %v619 = vmul.f32 %v611, %v617
        %621 = vrot.lane.b32.xlu0 %v619, 127
        %v622 = vpop.permute.xlu0 %621
        %v624 = vsub.f32 %v615, %v622
        %v625 = vmul.f32 %v624, 0.5
        %v626 = vtanh.pop %v625
        %v627 = vmul.f32 %v626, 0.5
        %v628 = vadd.f32 %v627, 0.5
        %v629 = vsub.f32 1.0, %v628
        %v630 = vld [vmem:[#allocation3 + $0x9] sm:$0xff]
        %v631 = vld [vmem:[#allocation3 + $0x11] sm:$0xff]
        %v632 = vld [vmem:[#allocation3 + $0x19] sm:$0xff]
        %v633 = vld [vmem:[#allocation3 + $0x21] sm:$0xff]
        %v634 = vld [vmem:[#allocation3 + $0x29] sm:$0xff]
        %v635 = vld [vmem:[#allocation3 + $0x31] sm:$0xff]
        %v636 = vld [vmem:[#allocation3 + $0x39] sm:$0xff]
        %v637 = vld [vmem:[#allocation3 + $0x41] sm:$0xff]
        %v638 = vld [vmem:[#allocation3 + $0x49] sm:$0xff]
        %v639 = vld [vmem:[#allocation3 + $0x51] sm:$0xff]
        %v640 = vld [vmem:[#allocation3 + $0x59] sm:$0xff]
        %v641 = vld [vmem:[#allocation3 + $0x61] sm:$0xff]
        %v642 = vld [vmem:[#allocation3 + $0x69] sm:$0xff]
        %v643 = vld [vmem:[#allocation3 + $0x7] sm:$0xff]
        %v644 = vld [vmem:[#allocation3 + $0xf] sm:$0xff]
        %v645 = vld [vmem:[#allocation3 + $0x17] sm:$0xff]
        %v646 = vld [vmem:[#allocation3 + $0x1f] sm:$0xff]
        %v647 = vld [vmem:[#allocation3 + $0x27] sm:$0xff]
        %v648 = vld [vmem:[#allocation3 + $0x2f] sm:$0xff]
        %v649 = vld [vmem:[#allocation3 + $0x37] sm:$0xff]
        %v650 = vld [vmem:[#allocation3 + $0x3f] sm:$0xff]
        %v651 = vld [vmem:[#allocation3 + $0x47] sm:$0xff]
        %v652 = vld [vmem:[#allocation3 + $0x4f] sm:$0xff]
        %v653 = vld [vmem:[#allocation3 + $0x57] sm:$0xff]
        %v654 = vld [vmem:[#allocation3 + $0x5f] sm:$0xff]
        %v655 = vld [vmem:[#allocation3 + $0x67] sm:$0xff]
        %v656 = vlaneseq
        %v657 = vshrl.u32 %v656, 7
        %v658 = vadd.s32 %v657, 8
        %v659 = vadd.s32 %v657, 16
        %v660 = vadd.s32 %v657, 24
        %v661 = vadd.s32 %v657, 32
        %v662 = vadd.s32 %v657, 40
        %v663 = vadd.s32 %v657, 48
        %v664 = vadd.s32 %v657, 56
        %v665 = vadd.s32 %v657, 64
        %v666 = vadd.s32 %v657, 72
        %v667 = vadd.s32 %v657, 80
        %v668 = vadd.s32 %v657, 88
        %v669 = vadd.s32 %v657, 96
        %vm670 = vcmp.eq.s32.totalorder %v657, 0
        %vm671 = vcmp.eq.s32.totalorder %v658, 0
        %vm672 = vcmp.eq.s32.totalorder %v659, 0
        %vm673 = vcmp.eq.s32.totalorder %v660, 0
        %vm674 = vcmp.eq.s32.totalorder %v661, 0
        %vm675 = vcmp.eq.s32.totalorder %v662, 0
        %vm676 = vcmp.eq.s32.totalorder %v663, 0
        %vm677 = vcmp.eq.s32.totalorder %v664, 0
        %vm678 = vcmp.eq.s32.totalorder %v665, 0
        %vm679 = vcmp.eq.s32.totalorder %v666, 0
        %vm680 = vcmp.eq.s32.totalorder %v667, 0
        %vm681 = vcmp.eq.s32.totalorder %v668, 0
        %vm682 = vcmp.eq.s32.totalorder %v669, 0
        %v683 = vlaneseq
        %v684 = vshrl.u32 %v683, 7
        %v685 = vsub.s32 0, %v684
        %v686 = vrot.slane %v600, %v685
        %700 = vrot.lane.b32.xlu0 %v643, 16
        %v701 = vpop.permute.xlu0 %700
        %702 = vrot.lane.b32.xlu0 %v644, 16
        %v703 = vpop.permute.xlu0 %702
        %704 = vrot.lane.b32.xlu0 %v645, 16
        %v705 = vpop.permute.xlu0 %704
        %706 = vrot.lane.b32.xlu0 %v646, 16
        %v707 = vpop.permute.xlu0 %706
        %708 = vrot.lane.b32.xlu0 %v647, 16
        %v709 = vpop.permute.xlu0 %708
        %710 = vrot.lane.b32.xlu0 %v648, 16
        %v711 = vpop.permute.xlu0 %710
        %712 = vrot.lane.b32.xlu0 %v649, 16
        %v713 = vpop.permute.xlu0 %712
        %714 = vrot.lane.b32.xlu0 %v650, 16
        %v715 = vpop.permute.xlu0 %714
        %716 = vrot.lane.b32.xlu0 %v651, 16
        %v717 = vpop.permute.xlu0 %716
        %718 = vrot.lane.b32.xlu0 %v652, 16
        %v719 = vpop.permute.xlu0 %718
        %720 = vrot.lane.b32.xlu0 %v653, 16
        %v721 = vpop.permute.xlu0 %720
        %722 = vrot.lane.b32.xlu0 %v654, 16
        %v723 = vpop.permute.xlu0 %722
        %724 = vrot.lane.b32.xlu0 %v655, 16
        %v725 = vpop.permute.xlu0 %724
        %v739 = vsel %vm670, %v686, %v701
        %v740 = vsel %vm671, %v686, %v703
        %v741 = vsel %vm672, %v686, %v705
        %v742 = vsel %vm673, %v686, %v707
        %v743 = vsel %vm674, %v686, %v709
        %v744 = vsel %vm675, %v686, %v711
        %v745 = vsel %vm676, %v686, %v713
        %v746 = vsel %vm677, %v686, %v715
        %v747 = vsel %vm678, %v686, %v717
        %v748 = vsel %vm679, %v686, %v719
        %v749 = vsel %vm680, %v686, %v721
        %v750 = vsel %vm681, %v686, %v723
        %v751 = vsel %vm682, %v686, %v725
        %753 = vrot.lane.b32.xlu0 %v628, 120
        %v754 = vpop.permute.xlu0 %753
        %s755 = vtos %v754
        %v756 = vstv %s755
        %v758 = vmul.f32 %v756, %v739
        %v759 = vmul.f32 %v756, %v740
        %v760 = vmul.f32 %v756, %v741
        %v761 = vmul.f32 %v756, %v742
        %v762 = vmul.f32 %v756, %v743
        %v763 = vmul.f32 %v756, %v744
        %v764 = vmul.f32 %v756, %v745
        %v765 = vmul.f32 %v756, %v746
        %v766 = vmul.f32 %v756, %v747
        %v767 = vmul.f32 %v756, %v748
        %v768 = vmul.f32 %v756, %v749
        %v769 = vmul.f32 %v756, %v750
        %v770 = vmul.f32 %v756, %v751
        %772 = vrot.lane.b32.xlu0 %v629, 120
        %v773 = vpop.permute.xlu0 %772
        %s774 = vtos %v773
        %v775 = vstv %s774
        %v777 = vmul.f32 %v775, %v630
        %v778 = vmul.f32 %v775, %v631
        %v779 = vmul.f32 %v775, %v632
        %v780 = vmul.f32 %v775, %v633
        %v781 = vmul.f32 %v775, %v634
        %v782 = vmul.f32 %v775, %v635
        %v783 = vmul.f32 %v775, %v636
        %v784 = vmul.f32 %v775, %v637
        %v785 = vmul.f32 %v775, %v638
        %v786 = vmul.f32 %v775, %v639
        %v787 = vmul.f32 %v775, %v640
        %v788 = vmul.f32 %v775, %v641
        %v789 = vmul.f32 %v775, %v642
        %803 = vrot.lane.b32.xlu0 %v777, 16
        %v804 = vpop.permute.xlu0 %803
        %805 = vrot.lane.b32.xlu0 %v778, 16
        %v806 = vpop.permute.xlu0 %805
        %807 = vrot.lane.b32.xlu0 %v779, 16
        %v808 = vpop.permute.xlu0 %807
        %809 = vrot.lane.b32.xlu0 %v780, 16
        %v810 = vpop.permute.xlu0 %809
        %811 = vrot.lane.b32.xlu0 %v781, 16
        %v812 = vpop.permute.xlu0 %811
        %813 = vrot.lane.b32.xlu0 %v782, 16
        %v814 = vpop.permute.xlu0 %813
        %815 = vrot.lane.b32.xlu0 %v783, 16
        %v816 = vpop.permute.xlu0 %815
        %817 = vrot.lane.b32.xlu0 %v784, 16
        %v818 = vpop.permute.xlu0 %817
        %819 = vrot.lane.b32.xlu0 %v785, 16
        %v820 = vpop.permute.xlu0 %819
        %821 = vrot.lane.b32.xlu0 %v786, 16
        %v822 = vpop.permute.xlu0 %821
        %823 = vrot.lane.b32.xlu0 %v787, 16
        %v824 = vpop.permute.xlu0 %823
        %825 = vrot.lane.b32.xlu0 %v788, 16
        %v826 = vpop.permute.xlu0 %825
        %827 = vrot.lane.b32.xlu0 %v789, 16
        %v828 = vpop.permute.xlu0 %827
        %v842 = vadd.f32 %v758, %v804
        %v843 = vadd.f32 %v759, %v806
        %v844 = vadd.f32 %v760, %v808
        %v845 = vadd.f32 %v761, %v810
        %v846 = vadd.f32 %v762, %v812
        %v847 = vadd.f32 %v763, %v814
        %v848 = vadd.f32 %v764, %v816
        %v849 = vadd.f32 %v765, %v818
        %v850 = vadd.f32 %v766, %v820
        %v851 = vadd.f32 %v767, %v822
        %v852 = vadd.f32 %v768, %v824
        %v853 = vadd.f32 %v769, %v826
        %v854 = vadd.f32 %v770, %v828
        %868 = vrot.lane.b32.xlu0 %v842, 112
        %v869 = vpop.permute.xlu0 %868
        %870 = vrot.lane.b32.xlu0 %v843, 112
        %v871 = vpop.permute.xlu0 %870
        %872 = vrot.lane.b32.xlu0 %v844, 112
        %v873 = vpop.permute.xlu0 %872
        %874 = vrot.lane.b32.xlu0 %v845, 112
        %v875 = vpop.permute.xlu0 %874
        %876 = vrot.lane.b32.xlu0 %v846, 112
        %v877 = vpop.permute.xlu0 %876
        %878 = vrot.lane.b32.xlu0 %v847, 112
        %v879 = vpop.permute.xlu0 %878
        %880 = vrot.lane.b32.xlu0 %v848, 112
        %v881 = vpop.permute.xlu0 %880
        %882 = vrot.lane.b32.xlu0 %v849, 112
        %v883 = vpop.permute.xlu0 %882
        %884 = vrot.lane.b32.xlu0 %v850, 112
        %v885 = vpop.permute.xlu0 %884
        %886 = vrot.lane.b32.xlu0 %v851, 112
        %v887 = vpop.permute.xlu0 %886
        %888 = vrot.lane.b32.xlu0 %v852, 112
        %v889 = vpop.permute.xlu0 %888
        %890 = vrot.lane.b32.xlu0 %v853, 112
        %v891 = vpop.permute.xlu0 %890
        %892 = vrot.lane.b32.xlu0 %v854, 112
        %v893 = vpop.permute.xlu0 %892
        %907 = vst.msk [vmem:[#allocation3 + $0x8] sm:$0xff] %vm476, %v869
        %908 = vst.msk [vmem:[#allocation3 + $0x10] sm:$0xff] %vm476, %v871
        %909 = vst.msk [vmem:[#allocation3 + $0x18] sm:$0xff] %vm476, %v873
        %910 = vst.msk [vmem:[#allocation3 + $0x20] sm:$0xff] %vm476, %v875
        %911 = vst.msk [vmem:[#allocation3 + $0x28] sm:$0xff] %vm476, %v877
        %912 = vst.msk [vmem:[#allocation3 + $0x30] sm:$0xff] %vm476, %v879
        %913 = vst.msk [vmem:[#allocation3 + $0x38] sm:$0xff] %vm476, %v881
        %914 = vst.msk [vmem:[#allocation3 + $0x40] sm:$0xff] %vm476, %v883
        %915 = vst.msk [vmem:[#allocation3 + $0x48] sm:$0xff] %vm476, %v885
        %916 = vst.msk [vmem:[#allocation3 + $0x50] sm:$0xff] %vm476, %v887
        %917 = vst.msk [vmem:[#allocation3 + $0x58] sm:$0xff] %vm476, %v889
        %918 = vst.msk [vmem:[#allocation3 + $0x60] sm:$0xff] %vm476, %v891
        %919 = vst.msk [vmem:[#allocation3 + $0x68] sm:$0xff] %vm476, %v893
        %920 = vst.msk [vmem:[%s8] sm:$0xff] %vm476, %v869
        %921 = vst.msk [vmem:[%s8 + $0x8] sm:$0xff] %vm476, %v871
        %922 = vst.msk [vmem:[%s8 + $0x10] sm:$0xff] %vm476, %v873
        %923 = vst.msk [vmem:[%s8 + $0x18] sm:$0xff] %vm476, %v875
        %924 = vst.msk [vmem:[%s8 + $0x20] sm:$0xff] %vm476, %v877
        %925 = vst.msk [vmem:[%s8 + $0x28] sm:$0xff] %vm476, %v879
        %926 = vst.msk [vmem:[%s8 + $0x30] sm:$0xff] %vm476, %v881
        %927 = vst.msk [vmem:[%s8 + $0x38] sm:$0xff] %vm476, %v883
        %928 = vst.msk [vmem:[%s8 + $0x40] sm:$0xff] %vm476, %v885
        %929 = vst.msk [vmem:[%s8 + $0x48] sm:$0xff] %vm476, %v887
        %930 = vst.msk [vmem:[%s8 + $0x50] sm:$0xff] %vm476, %v889
        %931 = vst.msk [vmem:[%s8 + $0x58] sm:$0xff] %vm476, %v891
        %932 = vst.msk [vmem:[%s8 + $0x60] sm:$0xff] %vm476, %v893
        %s933 = sand.u32 %s168, 1
        %s934 = scalar_lea.sflag [#allocation5], %s933
        %s935 = sand.u32 %s168, 1
        %s936 = scalar_lea.vmem [#allocation4], %s935
        // Predicated region
        $region49: #{srnn_forward.1} parent=43 // pred_check
          %p937 = pneg %p178
        $region50: #{srnn_forward.1} parent=43 // pred_check_branch
          %939 = sbr.rel (%p937) target = $region52
        $region51: #{srnn_forward.1} parent=43 // pred_region
          %s941 = ssub.s32 16, 16
          %942 = vsyncadd %s934, %s941
          %s943 = smul.addr %s24, 16
          %s944 = scalar_lea.hbm %s6, %s943
          %s946 = sshll.u32 %s936, 4
          %s947 = int_to_ptr.vmem [resolvable:$true] %s946
          %949 = dma.vmem_to_hbm [thread:$0]  %s947, 16, %s944, %s934
        $region52: #{srnn_forward.1} parent=43 // pred_fallthru
          _
        // Predicated region
        $region53: #{srnn_forward.1} parent=43 // pred_check
          %p950 = pneg %p199
        $region54: #{srnn_forward.1} parent=43 // pred_check_branch
          %952 = sbr.rel (%p950) target = $region56
        $region55: #{srnn_forward.1} parent=43 // pred_region
          %s954 = ssub.s32 16, 16
          %955 = vsyncadd [#allocation7], %s954
          %s957 = sshll.u32 [#allocation6], 4
          %s958 = int_to_ptr.vmem [resolvable:$true] %s957
          %960 = dma.vmem_to_hbm [thread:$0]  %s958, 16, %s7, [#allocation7]
        $region56: #{srnn_forward.1} parent=43 // pred_fallthru
          _
        // Predicated region
        $region57: #{srnn_forward.1} parent=43 // pred_check
          %p961 = pneg %p220
        $region58: #{srnn_forward.1} parent=43 // pred_check_branch
          %963 = sbr.rel (%p961) target = $region60
        $region59: #{srnn_forward.1} parent=43 // pred_region
          _
        $region60: #{srnn_forward.1} parent=43 // pred_fallthru
          _
        // Predicated region
        $region61: #{srnn_forward.1} parent=43 // pred_check
          %p964 = pneg %p199
        $region62: #{srnn_forward.1} parent=43 // pred_check_branch
          %966 = sbr.rel (%p964) target = $region64
        $region63: #{srnn_forward.1} parent=43 // pred_region
          %967 = dma.done [#allocation7], 16
        $region64: #{srnn_forward.1} parent=43 // pred_fallthru
          _
        // Predicated region
        $region65: #{srnn_forward.1} parent=43 // pred_check
          %p968 = pneg %p220
        $region66: #{srnn_forward.1} parent=43 // pred_check_branch
          %970 = sbr.rel (%p968) target = $region68
        $region67: #{srnn_forward.1} parent=43 // pred_region
          _
        $region68: #{srnn_forward.1} parent=43 // pred_fallthru
          _
      $region44: #{srnn_forward.1} parent=5 // pred_fallthru
        _
      %p971 = scmp.le.s32.totalorder 2, %s19
      // Predicated region
      $region69: #{srnn_forward.1} parent=5 // pred_check
        %p972 = pneg %p971
      $region70: #{srnn_forward.1} parent=5 // pred_check_branch
        %974 = sbr.rel (%p972) target = $region72
      $region71: #{srnn_forward.1} parent=5 // pred_region
        %s975 = ssub.s32 %s19, 2
        // Predicated region
        $region73: #{srnn_forward.1} parent=71 // pred_check
          %p976 = pneg %p184
        $region74: #{srnn_forward.1} parent=71 // pred_check_branch
          %978 = sbr.rel (%p976) target = $region76
        $region75: #{srnn_forward.1} parent=71 // pred_region
          %s979 = sand.u32 %s169, 1
          %s980 = scalar_lea.sflag [#allocation5], %s979
          %s981 = sand.u32 %s169, 1
          %s982 = scalar_lea.vmem [#allocation4], %s981
          %983 = dma.done %s980, 16
        $region76: #{srnn_forward.1} parent=71 // pred_fallthru
          _
      $region72: #{srnn_forward.1} parent=5 // pred_fallthru
        _
    $region6: #{srnn_forward.1} parent=1 // loop_footer
      %s23 = sadd.s32 1, %s19
    $region7: #{srnn_forward.1} parent=1 // loop_footer_branch
      %18 = sbr.rel target = $region3
    $region8: #{srnn_forward.1} parent=1 // loop_exit
      _
    %984 = vsyncpa [#allocation5], 1
    %s985 = scalar_lea.sflag [#allocation5], 1
    %986 = vsyncpa %s985, 1
    %987 = vsyncpa [#allocation7], 1

</llo_original>
